<compile_context>
chip_gen: v5e
topology: v5e:2x2
jax: 0.10.0
libtpu: 0.0.40
codegen_flags: <defaults>
</compile_context>

<pallas_src>
import functools

import jax
import jax.numpy as jnp
from jax.experimental import pallas as pl
from jax.experimental.pallas import tpu as pltpu

GLOBAL_DIM = 512       # self.hidden_dim in the PyTorch module
LANE = 128             # TPU lane width; fc3 output padded to a multiple of this
SUBLANE_BF16 = 16      # bf16 sublane-tile height; slab segments aligned to this


def _round_up(n, m):
    return ((n + m - 1) // m) * m


def _fused_mlp_kernel(x_ref, dec_ref, fc3_ref, o_ref, *, class_dim,
                      hidden_dim, num_relu_layers):
    """Fully fused MLP forward.

    dec_ref layout (bf16, width = hidden_dim), per ReLU layer i with input
    width d_in (class_dim for layer 0, hidden_dim after):
        rows [off, off+d_in)                    : weight (d_in, hidden) [in, out]
        rows [round_up(off+d_in,16), +1)        : bias   (1, hidden)
    fc3_ref layout (bf16, width = padded m1_dim):
        rows [0, hidden_dim)                    : weight
        row  [hidden_dim]                       : bias
    All segment starts are multiples of 16 rows, so static slices stay
    tile-aligned.  Compute: bf16 MXU operands, f32 accumulation, f32
    bias-add/ReLU.
    """
    h = x_ref[...]  # f32 (M, class_dim)
    off = 0
    d_in = class_dim
    for _ in range(num_relu_layers):
        w = dec_ref[off:off + d_in, :]                       # bf16 (d_in, hid)
        off = _round_up(off + d_in, SUBLANE_BF16)
        b = dec_ref[off:off + 1, :].astype(jnp.float32)      # (1, hid)
        off += SUBLANE_BF16
        h = jnp.maximum(
            jnp.dot(h.astype(jnp.bfloat16), w,
                    preferred_element_type=jnp.float32) + b, 0.0)
        d_in = hidden_dim

    w3 = fc3_ref[:hidden_dim, :]                             # bf16 (hid, m1_pad)
    b3 = fc3_ref[hidden_dim:hidden_dim + 1, :].astype(jnp.float32)
    o_ref[...] = (jnp.dot(h.astype(jnp.bfloat16), w3,
                          preferred_element_type=jnp.float32)
                  + b3).astype(o_ref.dtype)


def init_decoder_brain_params(key, class_dim, m1_dim, num_hidden_layers,
                              hidden_dim=GLOBAL_DIM):
    """Deterministic synthetic parameters, packed into two bf16 slabs.

    dec_slab: all dec-stack weights (stored pre-transposed as (in, out)) and
              biases concatenated along rows; each segment start is aligned to
              16 rows.
    fc3_slab: fc3 weight (hidden, m1_pad) with m1_pad = round_up(m1_dim, 128)
              plus the bias as row `hidden_dim`; columns >= m1_dim are zero.
    """
    dims_in = [class_dim] + [hidden_dim] * (num_hidden_layers - 1)
    dec_rows = sum(_round_up(d, SUBLANE_BF16) + SUBLANE_BF16 for d in dims_in)
    dec_slab = jnp.zeros((dec_rows, hidden_dim), jnp.bfloat16)

    off = 0
    for d_in in dims_in:
        key, kw, kb = jax.random.split(key, 3)
        w = (jax.random.normal(kw, (d_in, hidden_dim), jnp.float32)
             * 0.02).astype(jnp.bfloat16)
        b = (jax.random.normal(kb, (1, hidden_dim), jnp.float32)
             * 0.02).astype(jnp.bfloat16)
        dec_slab = dec_slab.at[off:off + d_in, :].set(w)
        off = _round_up(off + d_in, SUBLANE_BF16)
        dec_slab = dec_slab.at[off:off + 1, :].set(b)
        off += SUBLANE_BF16

    key, kw, kb = jax.random.split(key, 3)
    m1_pad = _round_up(m1_dim, LANE)
    fc3_slab = jnp.zeros((hidden_dim + SUBLANE_BF16, m1_pad), jnp.bfloat16)
    w3 = (jax.random.normal(kw, (hidden_dim, m1_dim), jnp.float32)
          * 0.02).astype(jnp.bfloat16)
    b3 = (jax.random.normal(kb, (1, m1_dim), jnp.float32)
          * 0.02).astype(jnp.bfloat16)
    fc3_slab = fc3_slab.at[:hidden_dim, :m1_dim].set(w3)
    fc3_slab = fc3_slab.at[hidden_dim:hidden_dim + 1, :m1_dim].set(b3)

    return {"dec_slab": dec_slab, "fc3_slab": fc3_slab}


@jax.jit
def decoder_brain_forward_padded(params, style_latent_space,
                                 class_latent_space):
    """Hot-path forward.  Returns (x_hat_padded, 0.75).

    x_hat_padded has its last dim padded up to a multiple of 128 lanes
    (lane-dense store); slice off the padding in the consumer (or fuse the
    consumer), not here — keeps the latency-bound path to a single dispatch.
    style_latent_space is unused (as in the PyTorch module).
    """
    del style_latent_space
    x = class_latent_space.astype(jnp.float32)
    dec_slab = params["dec_slab"]
    fc3_slab = params["fc3_slab"]

    M, class_dim = x.shape
    hidden_dim = dec_slab.shape[1]
    m1_pad = fc3_slab.shape[1]
    # Recover the static layer count from the slab layout.
    first_seg = _round_up(class_dim, SUBLANE_BF16) + SUBLANE_BF16
    num_relu_layers = 1 + (dec_slab.shape[0] - first_seg) // (hidden_dim
                                                              + SUBLANE_BF16)

    kernel = functools.partial(_fused_mlp_kernel, class_dim=class_dim,
                               hidden_dim=hidden_dim,
                               num_relu_layers=num_relu_layers)
    vmem_spec = pl.BlockSpec(memory_space=pltpu.MemorySpace.VMEM)

    out_padded = pl.pallas_call(
        kernel,
        out_shape=jax.ShapeDtypeStruct((M, m1_pad), jnp.float32),
        in_specs=[vmem_spec, vmem_spec, vmem_spec],
        out_specs=vmem_spec,
    )(x, dec_slab, fc3_slab)

    return out_padded, jnp.float32(0.75)


def decoder_brain_forward(params, style_latent_space, class_latent_space, *,
                          m1_dim):
    """Module-parity wrapper: DecoderBrain.forward -> (x_hat, 0.75)."""
    out_padded, const = decoder_brain_forward_padded(
        params, style_latent_space, class_latent_space)
    return out_padded[:, :m1_dim], const


def _reference_forward(params, class_latent_space, *, class_dim, m1_dim,
                       hidden_dim, num_hidden_layers):
    """Pure-JAX reference with identical casts (bf16 operands, f32 accum)."""
    dec_slab = params["dec_slab"]
    fc3_slab = params["fc3_slab"]
    h = class_latent_space.astype(jnp.float32)
    off = 0
    d_in = class_dim
    for _ in range(num_hidden_layers):
        w = dec_slab[off:off + d_in, :]
        off = _round_up(off + d_in, SUBLANE_BF16)
        b = dec_slab[off:off + 1, :].astype(jnp.float32)
        off += SUBLANE_BF16
        h = jnp.maximum(
            jnp.dot(h.astype(jnp.bfloat16), w,
                    preferred_element_type=jnp.float32) + b, 0.0)
        d_in = hidden_dim
    w3 = fc3_slab[:hidden_dim, :]
    b3 = fc3_slab[hidden_dim:hidden_dim + 1, :].astype(jnp.float32)
    out = jnp.dot(h.astype(jnp.bfloat16), w3,
                  preferred_element_type=jnp.float32) + b3
    return out[:, :m1_dim]


if __name__ == "__main__":
    # Small, module-consistent shapes.
    batch = 8
    class_dim = 32          # flags.class_dim
    m1_dim = 64             # flags.m1_dim
    num_hidden_layers = 2   # flags.num_hidden_layers
    style_dim = 16          # unused by forward, present for API parity

    key = jax.random.PRNGKey(0)
    key, k_style, k_class = jax.random.split(key, 3)
    style_latent_space = jax.random.normal(k_style, (batch, style_dim),
                                           jnp.float32)
    class_latent_space = jax.random.normal(k_class, (batch, class_dim),
                                           jnp.float32)

    params = init_decoder_brain_params(key, class_dim, m1_dim,
                                       num_hidden_layers)

    # Hot path: padded output, no post-kernel slice inside the jit.
    x_hat_padded, const = decoder_brain_forward_padded(
        params, style_latent_space, class_latent_space)
    x_hat_padded = jax.block_until_ready(x_hat_padded)
    const = jax.block_until_ready(const)

    # Module-parity view for the correctness check (slice is in the consumer).
    x_hat = x_hat_padded[:, :m1_dim]

    ref = _reference_forward(params, class_latent_space, class_dim=class_dim,
                             m1_dim=m1_dim, hidden_dim=GLOBAL_DIM,
                             num_hidden_layers=num_hidden_layers)

    assert x_hat.shape == (batch, m1_dim), x_hat.shape
    # bf16 weights -> loosened tolerance vs. the earlier all-f32 version.
    assert jnp.allclose(x_hat, ref, atol=1e-2, rtol=1e-2)
    assert float(const) == 0.75

    print("KERNEL_OK")
</pallas_src>

<mosaic_0001>
module attributes {stable_mosaic.version = 11 : i64} {
  func.func @_fused_mlp_kernel(%arg0: memref<8x32xf32, #tpu.memory_space<vmem>>, %arg1: memref<576x512xbf16, #tpu.memory_space<vmem>>, %arg2: memref<528x128xbf16, #tpu.memory_space<vmem>>, %arg3: memref<8x128xf32, #tpu.memory_space<vmem>>) attributes {dimension_semantics = [], scalar_prefetch = 0 : i64, scratch_operands = 0 : i64, tpu.core_type = #tpu.core_type<tc>} {
    %c0 = arith.constant 0 : index
    %c0_0 = arith.constant 0 : index
    %0 = vector.load %arg0[%c0, %c0_0] : memref<8x32xf32, #tpu.memory_space<vmem>>, vector<8x32xf32>
    %c0_1 = arith.constant 0 : index
    %c0_2 = arith.constant 0 : index
    %1 = vector.load %arg1[%c0_1, %c0_2] : memref<576x512xbf16, #tpu.memory_space<vmem>>, vector<32x512xbf16>
    %c32 = arith.constant 32 : index
    %c0_3 = arith.constant 0 : index
    %2 = vector.load %arg1[%c32, %c0_3] : memref<576x512xbf16, #tpu.memory_space<vmem>>, vector<1x512xbf16>
    %3 = arith.extf %2 : vector<1x512xbf16> to vector<1x512xf32>
    %4 = arith.truncf %0 : vector<8x32xf32> to vector<8x32xbf16>
    %cst = arith.constant dense<0.000000e+00> : vector<8x512xf32>
    %5 = tpu.matmul %4, %1, %cst {dimension_numbers = #tpu.dot_dimension_numbers<[1], [0], [0], [1], [0, 0, 1, 1], [], []>} : vector<8x32xbf16>, vector<32x512xbf16>, vector<8x512xf32> -> vector<8x512xf32>
    %6 = vector.broadcast %3 : vector<1x512xf32> to vector<8x512xf32>
    %7 = arith.addf %5, %6 : vector<8x512xf32>
    %cst_4 = arith.constant 0.000000e+00 : f32
    %8 = vector.broadcast %cst_4 : f32 to vector<8x512xf32>
    %9 = arith.maximumf %7, %8 : vector<8x512xf32>
    %c48 = arith.constant 48 : index
    %c0_5 = arith.constant 0 : index
    %10 = vector.load %arg1[%c48, %c0_5] : memref<576x512xbf16, #tpu.memory_space<vmem>>, vector<512x512xbf16>
    %c560 = arith.constant 560 : index
    %c0_6 = arith.constant 0 : index
    %11 = vector.load %arg1[%c560, %c0_6] : memref<576x512xbf16, #tpu.memory_space<vmem>>, vector<1x512xbf16>
    %12 = arith.extf %11 : vector<1x512xbf16> to vector<1x512xf32>
    %13 = arith.truncf %9 : vector<8x512xf32> to vector<8x512xbf16>
    %cst_7 = arith.constant dense<0.000000e+00> : vector<8x512xf32>
    %14 = tpu.matmul %13, %10, %cst_7 {dimension_numbers = #tpu.dot_dimension_numbers<[1], [0], [0], [1], [0, 0, 1, 1], [], []>} : vector<8x512xbf16>, vector<512x512xbf16>, vector<8x512xf32> -> vector<8x512xf32>
    %15 = vector.broadcast %12 : vector<1x512xf32> to vector<8x512xf32>
    %16 = arith.addf %14, %15 : vector<8x512xf32>
    %cst_8 = arith.constant 0.000000e+00 : f32
    %17 = vector.broadcast %cst_8 : f32 to vector<8x512xf32>
    %18 = arith.maximumf %16, %17 : vector<8x512xf32>
    %c0_9 = arith.constant 0 : index
    %c0_10 = arith.constant 0 : index
    %19 = vector.load %arg2[%c0_9, %c0_10] : memref<528x128xbf16, #tpu.memory_space<vmem>>, vector<512x128xbf16>
    %c512 = arith.constant 512 : index
    %c0_11 = arith.constant 0 : index
    %20 = vector.load %arg2[%c512, %c0_11] : memref<528x128xbf16, #tpu.memory_space<vmem>>, vector<1x128xbf16>
    %21 = arith.extf %20 : vector<1x128xbf16> to vector<1x128xf32>
    %22 = arith.truncf %18 : vector<8x512xf32> to vector<8x512xbf16>
    %cst_12 = arith.constant dense<0.000000e+00> : vector<8x128xf32>
    %23 = tpu.matmul %22, %19, %cst_12 {dimension_numbers = #tpu.dot_dimension_numbers<[1], [0], [0], [1], [0, 0, 1, 1], [], []>} : vector<8x512xbf16>, vector<512x128xbf16>, vector<8x128xf32> -> vector<8x128xf32>
    %24 = vector.broadcast %21 : vector<1x128xf32> to vector<8x128xf32>
    %25 = arith.addf %23, %24 : vector<8x128xf32>
    %c0_13 = arith.constant 0 : index
    %c0_14 = arith.constant 0 : index
    %26 = vector.load %arg3[%c0_13, %c0_14] : memref<8x128xf32, #tpu.memory_space<vmem>>, vector<8x128xf32>
    tpu.vector_store %arg3[%c0_13, %c0_14], %25 {strides = array<i32>} : memref<8x128xf32, #tpu.memory_space<vmem>>, vector<8x128xf32>,
    return
  }
}

</mosaic_0001>

<llo_original>
// kernel: decoder_brain_forward_padded.1
$region0: #{decoder_brain_forward_padded.1}
  #allocation0 [shape = 'u32[]', space=smem, size = 0x4, offset = 0x4, fixed_abs, tag = 'smem constant byte address 0x4 - core index']
  #allocation1 [shape = 'u32[72,128]{1,0:T(1,128)}', space=vmem, size = 0x9000, scoped, tag = 'internal scratch']
  %s0 = inlined_call_operand.hbm [shape: f32[8,32], index: 0, kind: input, shape index: {}]
  %s1 = inlined_call_operand.hbm [shape: bf16[576,512], index: 1, kind: input, shape index: {}]
  %s2 = inlined_call_operand.hbm [shape: bf16[528,128], index: 2, kind: input, shape index: {}]
  %s3 = inlined_call_operand.hbm [shape: f32[8,128], index: 3, kind: output, shape index: {}]
  %s4 = sld [smem:[#allocation0]]
  $region34: #{decoder_brain_forward_padded.1} parent=0
    _
  %s6 = ssub.s32 1, %s4
  %s7 = scalar_select 0, %s6, %s4
  $region1: #{decoder_brain_forward_padded.1} parent=0
    #allocation2 [shape = 'u8[4096]{0}', space=vmem, size = 0x1000, scoped, tag = 'input window, operand 0, single buffered']
    #allocation3 [shape = 's32[1]{0}', space=sflag, size = 0x4, scoped, tag = 'scoped memory for decoder_brain_forward_padded.1']
    #allocation4 [shape = 's32[1]{0}', space=sflag, size = 0x4, scoped, tag = 'scoped memory for decoder_brain_forward_padded.1']
    #allocation5 [shape = 'u8[589824]{0}', space=vmem, size = 0x90000, scoped, tag = 'input window, operand 1, single buffered']
    #allocation6 [shape = 's32[1]{0}', space=sflag, size = 0x4, scoped, tag = 'scoped memory for decoder_brain_forward_padded.1']
    #allocation7 [shape = 'u8[135168]{0}', space=vmem, size = 0x21000, scoped, tag = 'input window, operand 2, single buffered']
    #allocation8 [shape = 'u8[4096]{0}', space=vmem, size = 0x1000, scoped, tag = 'output window, operand 0, single buffered']
    %8 = vsyncpa [#allocation3], 0
    %9 = vsyncpa [#allocation6], 0
    %10 = vsyncpa [#allocation4], 0
    // Predicated region
    $region2: #{decoder_brain_forward_padded.1} parent=1 // pred_check
      _
    $region3: #{decoder_brain_forward_padded.1} parent=1 // pred_check_branch
      %12 = sbr.rel (0) target = $region5
    $region4: #{decoder_brain_forward_padded.1} parent=1 // pred_region
      %14 = vsyncadd [#allocation3], 0
      %s16 = sshll.u32 %s0, 4
      %s17 = int_to_ptr.hbm [resolvable:$true] %s16
      %s18 = sshll.u32 [#allocation2], 4
      %s19 = int_to_ptr.vmem [resolvable:$true] %s18
      %21 = dma.hbm_to_vmem [thread:$0]  %s17, 128, %s19, [#allocation3]
    $region5: #{decoder_brain_forward_padded.1} parent=1 // pred_fallthru
      _
    // Predicated region
    $region6: #{decoder_brain_forward_padded.1} parent=1 // pred_check
      _
    $region7: #{decoder_brain_forward_padded.1} parent=1 // pred_check_branch
      %23 = sbr.rel (0) target = $region9
    $region8: #{decoder_brain_forward_padded.1} parent=1 // pred_region
      %25 = vsyncadd [#allocation6], 0
      %s26 = sshll.u32 %s1, 4
      %s27 = int_to_ptr.hbm [resolvable:$true] %s26
      %s28 = sshll.u32 [#allocation5], 4
      %s29 = int_to_ptr.vmem [resolvable:$true] %s28
      %34 = dma.hbm_to_vmem [thread:$0]  %s27, 18432, %s29, [#allocation6], 256, 256, 16
    $region9: #{decoder_brain_forward_padded.1} parent=1 // pred_fallthru
      _
    // Predicated region
    $region10: #{decoder_brain_forward_padded.1} parent=1 // pred_check
      _
    $region11: #{decoder_brain_forward_padded.1} parent=1 // pred_check_branch
      %36 = sbr.rel (0) target = $region13
    $region12: #{decoder_brain_forward_padded.1} parent=1 // pred_region
      %38 = vsyncadd [#allocation6], 0
      %s39 = sshll.u32 %s2, 4
      %s40 = int_to_ptr.hbm [resolvable:$true] %s39
      %s41 = sshll.u32 [#allocation7], 4
      %s42 = int_to_ptr.vmem [resolvable:$true] %s41
      %47 = dma.hbm_to_vmem [thread:$0]  %s40, 4224, %s42, [#allocation6], 64, 64, 4
    $region13: #{decoder_brain_forward_padded.1} parent=1 // pred_fallthru
      _
    // Predicated region
    $region14: #{decoder_brain_forward_padded.1} parent=1 // pred_check
      _
    $region15: #{decoder_brain_forward_padded.1} parent=1 // pred_check_branch
      %49 = sbr.rel (0) target = $region17
    $region16: #{decoder_brain_forward_padded.1} parent=1 // pred_region
      %51 = dma.done [#allocation3], 128
    $region17: #{decoder_brain_forward_padded.1} parent=1 // pred_fallthru
      _
    // Predicated region
    $region18: #{decoder_brain_forward_padded.1} parent=1 // pred_check
      _
    $region19: #{decoder_brain_forward_padded.1} parent=1 // pred_check_branch
      %53 = sbr.rel (0) target = $region21
    $region20: #{decoder_brain_forward_padded.1} parent=1 // pred_region
      %55 = dma.done [#allocation6], 18432
    $region21: #{decoder_brain_forward_padded.1} parent=1 // pred_fallthru
      _
    // Predicated region
    $region22: #{decoder_brain_forward_padded.1} parent=1 // pred_check
      _
    $region23: #{decoder_brain_forward_padded.1} parent=1 // pred_check_branch
      %57 = sbr.rel (0) target = $region25
    $region24: #{decoder_brain_forward_padded.1} parent=1 // pred_region
      %59 = dma.done [#allocation6], 4224
    $region25: #{decoder_brain_forward_padded.1} parent=1 // pred_fallthru
      _
    %v61 = vld [vmem:[#allocation2] sm:$0xff]
    %v62 = vld [vmem:[#allocation5] sm:$0xff]
    %v63 = vld [vmem:[#allocation5 + $0x8] sm:$0xff]
    %v64 = vld [vmem:[#allocation5 + $0x10] sm:$0xff]
    %v65 = vld [vmem:[#allocation5 + $0x18] sm:$0xff]
    %v66 = vld [vmem:[#allocation5 + $0x20] sm:$0xff]
    %v67 = vld [vmem:[#allocation5 + $0x28] sm:$0xff]
    %v68 = vld [vmem:[#allocation5 + $0x30] sm:$0xff]
    %v69 = vld [vmem:[#allocation5 + $0x38] sm:$0xff]
    %v70 = vld [vmem:[#allocation5 + $0x40] sm:$0x11]
    %v71 = vld [vmem:[#allocation5 + $0x48] sm:$0x11]
    %v72 = vunpack.c.l.bf16 %v70
    %v73 = vunpack.c.h.bf16 %v70
    %v74 = vunpack.c.l.bf16 %v71
    %v75 = vunpack.c.h.bf16 %v71
    %v76 = vpack.c.bf16 %v61, %v61
    %v77 = vperm.slane %v72, 0
    %v78 = vperm.slane %v73, 0
    %v79 = vperm.slane %v74, 0
    %v80 = vperm.slane %v75, 0
    %v89 = vunpack.c.l.b16 %v62
    %v90 = vunpack.c.h.b16 %v62
    %v91 = vunpack.c.l.b16 %v63
    %v92 = vunpack.c.h.b16 %v63
    %v93 = vunpack.c.l.b16 %v64
    %v94 = vunpack.c.h.b16 %v64
    %v95 = vunpack.c.l.b16 %v65
    %v96 = vunpack.c.h.b16 %v65
    %v97 = vunpack.c.l.b16 %v66
    %v98 = vunpack.c.h.b16 %v66
    %v99 = vunpack.c.l.b16 %v67
    %v100 = vunpack.c.h.b16 %v67
    %v101 = vunpack.c.l.b16 %v68
    %v102 = vunpack.c.h.b16 %v68
    %v103 = vunpack.c.l.b16 %v69
    %v104 = vunpack.c.h.b16 %v69
    %v105 = vpack.c.b16 %v93, %v89
    %v106 = vpack.c.b16 %v94, %v90
    %v107 = vpack.c.b16 %v95, %v91
    %v108 = vpack.c.b16 %v96, %v92
    %v109 = vpack.c.b16 %v101, %v97
    %v110 = vpack.c.b16 %v102, %v98
    %v111 = vpack.c.b16 %v103, %v99
    %v112 = vpack.c.b16 %v104, %v100
    %vm121 = vcmask 261120
    %v123 = vsel %vm121, %v76, 0
    %125 = vmatpush.bf16.msra.mxu0 0
    %126 = vmatpush.bf16.msra.mxu0 0
    %127 = vmatpush.bf16.msra.mxu0 0
    %128 = vmatpush.bf16.msra.mxu0 0
    %129 = vmatpush.bf16.msra.mxu0 0
    %130 = vmatpush.bf16.msra.mxu0 0
    %131 = vmatpush.bf16.msra.mxu0 %v109
    %132 = vmatpush.bf16.msra.mxu0 %v105
    %133 = vmatmul.bf16.gmra.mxu0 %v123
    %v134 = vpop.f32.mrf.mxu0
    %v135 = vadd.f32 %v77, %v134
    %v136 = vpop.f32.mrf.mxu0
    %137 = vdwg.mxu0
    %138 = vmatpush.bf16.msra.mxu0 0
    %139 = vmatpush.bf16.msra.mxu0 0
    %140 = vmatpush.bf16.msra.mxu0 0
    %141 = vmatpush.bf16.msra.mxu0 0
    %142 = vmatpush.bf16.msra.mxu0 0
    %143 = vmatpush.bf16.msra.mxu0 0
    %144 = vmatpush.bf16.msra.mxu0 %v110
    %145 = vmatpush.bf16.msra.mxu0 %v106
    %146 = vmatmul.bf16.gmra.mxu0 %v123
    %v147 = vpop.f32.mrf.mxu0
    %v148 = vadd.f32 %v78, %v147
    %v149 = vpop.f32.mrf.mxu0
    %150 = vdwg.mxu0
    %151 = vmatpush.bf16.msra.mxu0 0
    %152 = vmatpush.bf16.msra.mxu0 0
    %153 = vmatpush.bf16.msra.mxu0 0
    %154 = vmatpush.bf16.msra.mxu0 0
    %155 = vmatpush.bf16.msra.mxu0 0
    %156 = vmatpush.bf16.msra.mxu0 0
    %157 = vmatpush.bf16.msra.mxu0 %v111
    %158 = vmatpush.bf16.msra.mxu0 %v107
    %159 = vmatmul.bf16.gmra.mxu0 %v123
    %v160 = vpop.f32.mrf.mxu0
    %v161 = vadd.f32 %v79, %v160
    %v162 = vpop.f32.mrf.mxu0
    %163 = vdwg.mxu0
    %164 = vmatpush.bf16.msra.mxu0 0
    %165 = vmatpush.bf16.msra.mxu0 0
    %166 = vmatpush.bf16.msra.mxu0 0
    %167 = vmatpush.bf16.msra.mxu0 0
    %168 = vmatpush.bf16.msra.mxu0 0
    %169 = vmatpush.bf16.msra.mxu0 0
    %170 = vmatpush.bf16.msra.mxu0 %v112
    %171 = vmatpush.bf16.msra.mxu0 %v108
    %172 = vmatmul.bf16.gmra.mxu0 %v123
    %v173 = vpop.f32.mrf.mxu0
    %v174 = vadd.f32 %v80, %v173
    %v175 = vpop.f32.mrf.mxu0
    %176 = vdwg.mxu0
    %v177 = vmax.f32 %v135, 0.0
    %v178 = vmax.f32 %v148, 0.0
    %v179 = vmax.f32 %v161, 0.0
    %v180 = vmax.f32 %v174, 0.0
    %v181 = vld [vmem:[#allocation5 + $0x60] sm:$0xff]
    %v182 = vld [vmem:[#allocation5 + $0x68] sm:$0xff]
    %v183 = vld [vmem:[#allocation5 + $0x70] sm:$0xff]
    %v184 = vld [vmem:[#allocation5 + $0x78] sm:$0xff]
    %v185 = vld [vmem:[#allocation5 + $0x80] sm:$0xff]
    %v186 = vld [vmem:[#allocation5 + $0x88] sm:$0xff]
    %v187 = vld [vmem:[#allocation5 + $0x90] sm:$0xff]
    %v188 = vld [vmem:[#allocation5 + $0x98] sm:$0xff]
    %v189 = vld [vmem:[#allocation5 + $0xa0] sm:$0xff]
    %v190 = vld [vmem:[#allocation5 + $0xa8] sm:$0xff]
    %v191 = vld [vmem:[#allocation5 + $0xb0] sm:$0xff]
    %v192 = vld [vmem:[#allocation5 + $0xb8] sm:$0xff]
    %v193 = vld [vmem:[#allocation5 + $0xc0] sm:$0xff]
    %v194 = vld [vmem:[#allocation5 + $0xc8] sm:$0xff]
    %v195 = vld [vmem:[#allocation5 + $0xd0] sm:$0xff]
    %v196 = vld [vmem:[#allocation5 + $0xd8] sm:$0xff]
    %v197 = vld [vmem:[#allocation5 + $0xe0] sm:$0xff]
    %v198 = vld [vmem:[#allocation5 + $0xe8] sm:$0xff]
    %v199 = vld [vmem:[#allocation5 + $0xf0] sm:$0xff]
    %v200 = vld [vmem:[#allocation5 + $0xf8] sm:$0xff]
    %v201 = vld [vmem:[#allocation5 + $0x100] sm:$0xff]
    %v202 = vld [vmem:[#allocation5 + $0x108] sm:$0xff]
    %v203 = vld [vmem:[#allocation5 + $0x110] sm:$0xff]
    %v204 = vld [vmem:[#allocation5 + $0x118] sm:$0xff]
    %v205 = vld [vmem:[#allocation5 + $0x120] sm:$0xff]
    %v206 = vld [vmem:[#allocation5 + $0x128] sm:$0xff]
    %v207 = vld [vmem:[#allocation5 + $0x130] sm:$0xff]
    %v208 = vld [vmem:[#allocation5 + $0x138] sm:$0xff]
    %v209 = vld [vmem:[#allocation5 + $0x140] sm:$0xff]
    %v210 = vld [vmem:[#allocation5 + $0x148] sm:$0xff]
    %v211 = vld [vmem:[#allocation5 + $0x150] sm:$0xff]
    %v212 = vld [vmem:[#allocation5 + $0x158] sm:$0xff]
    %v213 = vld [vmem:[#allocation5 + $0x160] sm:$0xff]
    %v214 = vld [vmem:[#allocation5 + $0x168] sm:$0xff]
    %v215 = vld [vmem:[#allocation5 + $0x170] sm:$0xff]
    %v216 = vld [vmem:[#allocation5 + $0x178] sm:$0xff]
    %v217 = vld [vmem:[#allocation5 + $0x180] sm:$0xff]
    %v218 = vld [vmem:[#allocation5 + $0x188] sm:$0xff]
    %v219 = vld [vmem:[#allocation5 + $0x190] sm:$0xff]
    %v220 = vld [vmem:[#allocation5 + $0x198] sm:$0xff]
    %v221 = vld [vmem:[#allocation5 + $0x1a0] sm:$0xff]
    %v222 = vld [vmem:[#allocation5 + $0x1a8] sm:$0xff]
    %v223 = vld [vmem:[#allocation5 + $0x1b0] sm:$0xff]
    %v224 = vld [vmem:[#allocation5 + $0x1b8] sm:$0xff]
    %v225 = vld [vmem:[#allocation5 + $0x1c0] sm:$0xff]
    %v226 = vld [vmem:[#allocation5 + $0x1c8] sm:$0xff]
    %v227 = vld [vmem:[#allocation5 + $0x1d0] sm:$0xff]
    %v228 = vld [vmem:[#allocation5 + $0x1d8] sm:$0xff]
    %v229 = vld [vmem:[#allocation5 + $0x1e0] sm:$0xff]
    %v230 = vld [vmem:[#allocation5 + $0x1e8] sm:$0xff]
    %v231 = vld [vmem:[#allocation5 + $0x1f0] sm:$0xff]
    %v232 = vld [vmem:[#allocation5 + $0x1f8] sm:$0xff]
    %v233 = vld [vmem:[#allocation5 + $0x200] sm:$0xff]
    %v234 = vld [vmem:[#allocation5 + $0x208] sm:$0xff]
    %v235 = vld [vmem:[#allocation5 + $0x210] sm:$0xff]
    %v236 = vld [vmem:[#allocation5 + $0x218] sm:$0xff]
    %v237 = vld [vmem:[#allocation5 + $0x220] sm:$0xff]
    %v238 = vld [vmem:[#allocation5 + $0x228] sm:$0xff]
    %v239 = vld [vmem:[#allocation5 + $0x230] sm:$0xff]
    %v240 = vld [vmem:[#allocation5 + $0x238] sm:$0xff]
    %v241 = vld [vmem:[#allocation5 + $0x240] sm:$0xff]
    %v242 = vld [vmem:[#allocation5 + $0x248] sm:$0xff]
    %v243 = vld [vmem:[#allocation5 + $0x250] sm:$0xff]
    %v244 = vld [vmem:[#allocation5 + $0x258] sm:$0xff]
    %v245 = vld [vmem:[#allocation5 + $0x260] sm:$0xff]
    %v246 = vld [vmem:[#allocation5 + $0x268] sm:$0xff]
    %v247 = vld [vmem:[#allocation5 + $0x270] sm:$0xff]
    %v248 = vld [vmem:[#allocation5 + $0x278] sm:$0xff]
    %v249 = vld [vmem:[#allocation5 + $0x280] sm:$0xff]
    %v250 = vld [vmem:[#allocation5 + $0x288] sm:$0xff]
    %v251 = vld [vmem:[#allocation5 + $0x290] sm:$0xff]
    %v252 = vld [vmem:[#allocation5 + $0x298] sm:$0xff]
    %v253 = vld [vmem:[#allocation5 + $0x2a0] sm:$0xff]
    %v254 = vld [vmem:[#allocation5 + $0x2a8] sm:$0xff]
    %v255 = vld [vmem:[#allocation5 + $0x2b0] sm:$0xff]
    %v256 = vld [vmem:[#allocation5 + $0x2b8] sm:$0xff]
    %v257 = vld [vmem:[#allocation5 + $0x2c0] sm:$0xff]
    %v258 = vld [vmem:[#allocation5 + $0x2c8] sm:$0xff]
    %v259 = vld [vmem:[#allocation5 + $0x2d0] sm:$0xff]
    %v260 = vld [vmem:[#allocation5 + $0x2d8] sm:$0xff]
    %v261 = vld [vmem:[#allocation5 + $0x2e0] sm:$0xff]
    %v262 = vld [vmem:[#allocation5 + $0x2e8] sm:$0xff]
    %v263 = vld [vmem:[#allocation5 + $0x2f0] sm:$0xff]
    %v264 = vld [vmem:[#allocation5 + $0x2f8] sm:$0xff]
    %v265 = vld [vmem:[#allocation5 + $0x300] sm:$0xff]
    %v266 = vld [vmem:[#allocation5 + $0x308] sm:$0xff]
    %v267 = vld [vmem:[#allocation5 + $0x310] sm:$0xff]
    %v268 = vld [vmem:[#allocation5 + $0x318] sm:$0xff]
    %v269 = vld [vmem:[#allocation5 + $0x320] sm:$0xff]
    %v270 = vld [vmem:[#allocation5 + $0x328] sm:$0xff]
    %v271 = vld [vmem:[#allocation5 + $0x330] sm:$0xff]
    %v272 = vld [vmem:[#allocation5 + $0x338] sm:$0xff]
    %v273 = vld [vmem:[#allocation5 + $0x340] sm:$0xff]
    %v274 = vld [vmem:[#allocation5 + $0x348] sm:$0xff]
    %v275 = vld [vmem:[#allocation5 + $0x350] sm:$0xff]
    %v276 = vld [vmem:[#allocation5 + $0x358] sm:$0xff]
    %v277 = vld [vmem:[#allocation5 + $0x360] sm:$0xff]
    %v278 = vld [vmem:[#allocation5 + $0x368] sm:$0xff]
    %v279 = vld [vmem:[#allocation5 + $0x370] sm:$0xff]
    %v280 = vld [vmem:[#allocation5 + $0x378] sm:$0xff]
    %v281 = vld [vmem:[#allocation5 + $0x380] sm:$0xff]
    %v282 = vld [vmem:[#allocation5 + $0x388] sm:$0xff]
    %v283 = vld [vmem:[#allocation5 + $0x390] sm:$0xff]
    %v284 = vld [vmem:[#allocation5 + $0x398] sm:$0xff]
    %v285 = vld [vmem:[#allocation5 + $0x3a0] sm:$0xff]
    %v286 = vld [vmem:[#allocation5 + $0x3a8] sm:$0xff]
    %v287 = vld [vmem:[#allocation5 + $0x3b0] sm:$0xff]
    %v288 = vld [vmem:[#allocation5 + $0x3b8] sm:$0xff]
    %v289 = vld [vmem:[#allocation5 + $0x3c0] sm:$0xff]
    %v290 = vld [vmem:[#allocation5 + $0x3c8] sm:$0xff]
    %v291 = vld [vmem:[#allocation5 + $0x3d0] sm:$0xff]
    %v292 = vld [vmem:[#allocation5 + $0x3d8] sm:$0xff]
    %v293 = vld [vmem:[#allocation5 + $0x3e0] sm:$0xff]
    %v294 = vld [vmem:[#allocation5 + $0x3e8] sm:$0xff]
    %v295 = vld [vmem:[#allocation5 + $0x3f0] sm:$0xff]
    %v296 = vld [vmem:[#allocation5 + $0x3f8] sm:$0xff]
    %v297 = vld [vmem:[#allocation5 + $0x400] sm:$0xff]
    %v298 = vld [vmem:[#allocation5 + $0x408] sm:$0xff]
    %v299 = vld [vmem:[#allocation5 + $0x410] sm:$0xff]
    %v300 = vld [vmem:[#allocation5 + $0x418] sm:$0xff]
    %v301 = vld [vmem:[#allocation5 + $0x420] sm:$0xff]
    %v302 = vld [vmem:[#allocation5 + $0x428] sm:$0xff]
    %v303 = vld [vmem:[#allocation5 + $0x430] sm:$0xff]
    %v304 = vld [vmem:[#allocation5 + $0x438] sm:$0xff]
    %v305 = vld [vmem:[#allocation5 + $0x440] sm:$0xff]
    %v306 = vld [vmem:[#allocation5 + $0x448] sm:$0xff]
    %v307 = vld [vmem:[#allocation5 + $0x450] sm:$0xff]
    %v308 = vld [vmem:[#allocation5 + $0x458] sm:$0xff]
    %v309 = vld [vmem:[#allocation5 + $0x460] sm:$0x11]
    %v310 = vld [vmem:[#allocation5 + $0x468] sm:$0x11]
    %v311 = vunpack.c.l.bf16 %v309
    %v312 = vunpack.c.h.bf16 %v309
    %v313 = vunpack.c.l.bf16 %v310
    %v314 = vunpack.c.h.bf16 %v310
    %v315 = vpack.c.bf16 %v177, %v177
    %v316 = vpack.c.bf16 %v178, %v178
    %v317 = vpack.c.bf16 %v179, %v179
    %v318 = vpack.c.bf16 %v180, %v180
    %v319 = vperm.slane %v311, 0
    %v320 = vperm.slane %v312, 0
    %v321 = vperm.slane %v313, 0
    %v322 = vperm.slane %v314, 0
    %v451 = vunpack.c.l.b16 %v181
    %v452 = vunpack.c.h.b16 %v181
    %v453 = vunpack.c.l.b16 %v182
    %v454 = vunpack.c.h.b16 %v182
    %v455 = vunpack.c.l.b16 %v183
    %v456 = vunpack.c.h.b16 %v183
    %v457 = vunpack.c.l.b16 %v184
    %v458 = vunpack.c.h.b16 %v184
    %v459 = vunpack.c.l.b16 %v185
    %v460 = vunpack.c.h.b16 %v185
    %v461 = vunpack.c.l.b16 %v186
    %v462 = vunpack.c.h.b16 %v186
    %v463 = vunpack.c.l.b16 %v187
    %v464 = vunpack.c.h.b16 %v187
    %v465 = vunpack.c.l.b16 %v188
    %v466 = vunpack.c.h.b16 %v188
    %v467 = vunpack.c.l.b16 %v189
    %v468 = vunpack.c.h.b16 %v189
    %v469 = vunpack.c.l.b16 %v190
    %v470 = vunpack.c.h.b16 %v190
    %v471 = vunpack.c.l.b16 %v191
    %v472 = vunpack.c.h.b16 %v191
    %v473 = vunpack.c.l.b16 %v192
    %v474 = vunpack.c.h.b16 %v192
    %v475 = vunpack.c.l.b16 %v193
    %v476 = vunpack.c.h.b16 %v193
    %v477 = vunpack.c.l.b16 %v194
    %v478 = vunpack.c.h.b16 %v194
    %v479 = vunpack.c.l.b16 %v195
    %v480 = vunpack.c.h.b16 %v195
    %v481 = vunpack.c.l.b16 %v196
    %v482 = vunpack.c.h.b16 %v196
    %v483 = vunpack.c.l.b16 %v197
    %v484 = vunpack.c.h.b16 %v197
    %v485 = vunpack.c.l.b16 %v198
    %v486 = vunpack.c.h.b16 %v198
    %v487 = vunpack.c.l.b16 %v199
    %v488 = vunpack.c.h.b16 %v199
    %v489 = vunpack.c.l.b16 %v200
    %v490 = vunpack.c.h.b16 %v200
    %v491 = vunpack.c.l.b16 %v201
    %v492 = vunpack.c.h.b16 %v201
    %v493 = vunpack.c.l.b16 %v202
    %v494 = vunpack.c.h.b16 %v202
    %v495 = vunpack.c.l.b16 %v203
    %v496 = vunpack.c.h.b16 %v203
    %v497 = vunpack.c.l.b16 %v204
    %v498 = vunpack.c.h.b16 %v204
    %v499 = vunpack.c.l.b16 %v205
    %v500 = vunpack.c.h.b16 %v205
    %v501 = vunpack.c.l.b16 %v206
    %v502 = vunpack.c.h.b16 %v206
    %v503 = vunpack.c.l.b16 %v207
    %v504 = vunpack.c.h.b16 %v207
    %v505 = vunpack.c.l.b16 %v208
    %v506 = vunpack.c.h.b16 %v208
    %v507 = vunpack.c.l.b16 %v209
    %v508 = vunpack.c.h.b16 %v209
    %v509 = vunpack.c.l.b16 %v210
    %v510 = vunpack.c.h.b16 %v210
    %v511 = vunpack.c.l.b16 %v211
    %v512 = vunpack.c.h.b16 %v211
    %v513 = vunpack.c.l.b16 %v212
    %v514 = vunpack.c.h.b16 %v212
    %v515 = vunpack.c.l.b16 %v213
    %v516 = vunpack.c.h.b16 %v213
    %v517 = vunpack.c.l.b16 %v214
    %v518 = vunpack.c.h.b16 %v214
    %v519 = vunpack.c.l.b16 %v215
    %v520 = vunpack.c.h.b16 %v215
    %v521 = vunpack.c.l.b16 %v216
    %v522 = vunpack.c.h.b16 %v216
    %v523 = vunpack.c.l.b16 %v217
    %v524 = vunpack.c.h.b16 %v217
    %v525 = vunpack.c.l.b16 %v218
    %v526 = vunpack.c.h.b16 %v218
    %v527 = vunpack.c.l.b16 %v219
    %v528 = vunpack.c.h.b16 %v219
    %v529 = vunpack.c.l.b16 %v220
    %v530 = vunpack.c.h.b16 %v220
    %v531 = vunpack.c.l.b16 %v221
    %v532 = vunpack.c.h.b16 %v221
    %v533 = vunpack.c.l.b16 %v222
    %v534 = vunpack.c.h.b16 %v222
    %v535 = vunpack.c.l.b16 %v223
    %v536 = vunpack.c.h.b16 %v223
    %v537 = vunpack.c.l.b16 %v224
    %v538 = vunpack.c.h.b16 %v224
    %v539 = vunpack.c.l.b16 %v225
    %v540 = vunpack.c.h.b16 %v225
    %v541 = vunpack.c.l.b16 %v226
    %v542 = vunpack.c.h.b16 %v226
    %v543 = vunpack.c.l.b16 %v227
    %v544 = vunpack.c.h.b16 %v227
    %v545 = vunpack.c.l.b16 %v228
    %v546 = vunpack.c.h.b16 %v228
    %v547 = vunpack.c.l.b16 %v229
    %v548 = vunpack.c.h.b16 %v229
    %v549 = vunpack.c.l.b16 %v230
    %v550 = vunpack.c.h.b16 %v230
    %v551 = vunpack.c.l.b16 %v231
    %v552 = vunpack.c.h.b16 %v231
    %v553 = vunpack.c.l.b16 %v232
    %v554 = vunpack.c.h.b16 %v232
    %v555 = vunpack.c.l.b16 %v233
    %v556 = vunpack.c.h.b16 %v233
    %v557 = vunpack.c.l.b16 %v234
    %v558 = vunpack.c.h.b16 %v234
    %v559 = vunpack.c.l.b16 %v235
    %v560 = vunpack.c.h.b16 %v235
    %v561 = vunpack.c.l.b16 %v236
    %v562 = vunpack.c.h.b16 %v236
    %v563 = vunpack.c.l.b16 %v237
    %v564 = vunpack.c.h.b16 %v237
    %v565 = vunpack.c.l.b16 %v238
    %v566 = vunpack.c.h.b16 %v238
    %v567 = vunpack.c.l.b16 %v239
    %v568 = vunpack.c.h.b16 %v239
    %v569 = vunpack.c.l.b16 %v240
    %v570 = vunpack.c.h.b16 %v240
    %v571 = vunpack.c.l.b16 %v241
    %v572 = vunpack.c.h.b16 %v241
    %v573 = vunpack.c.l.b16 %v242
    %v574 = vunpack.c.h.b16 %v242
    %v575 = vunpack.c.l.b16 %v243
    %v576 = vunpack.c.h.b16 %v243
    %v577 = vunpack.c.l.b16 %v244
    %v578 = vunpack.c.h.b16 %v244
    %v579 = vunpack.c.l.b16 %v245
    %v580 = vunpack.c.h.b16 %v245
    %v581 = vunpack.c.l.b16 %v246
    %v582 = vunpack.c.h.b16 %v246
    %v583 = vunpack.c.l.b16 %v247
    %v584 = vunpack.c.h.b16 %v247
    %v585 = vunpack.c.l.b16 %v248
    %v586 = vunpack.c.h.b16 %v248
    %v587 = vunpack.c.l.b16 %v249
    %v588 = vunpack.c.h.b16 %v249
    %v589 = vunpack.c.l.b16 %v250
    %v590 = vunpack.c.h.b16 %v250
    %v591 = vunpack.c.l.b16 %v251
    %v592 = vunpack.c.h.b16 %v251
    %v593 = vunpack.c.l.b16 %v252
    %v594 = vunpack.c.h.b16 %v252
    %v595 = vunpack.c.l.b16 %v253
    %v596 = vunpack.c.h.b16 %v253
    %v597 = vunpack.c.l.b16 %v254
    %v598 = vunpack.c.h.b16 %v254
    %v599 = vunpack.c.l.b16 %v255
    %v600 = vunpack.c.h.b16 %v255
    %v601 = vunpack.c.l.b16 %v256
    %v602 = vunpack.c.h.b16 %v256
    %v603 = vunpack.c.l.b16 %v257
    %v604 = vunpack.c.h.b16 %v257
    %v605 = vunpack.c.l.b16 %v258
    %v606 = vunpack.c.h.b16 %v258
    %v607 = vunpack.c.l.b16 %v259
    %v608 = vunpack.c.h.b16 %v259
    %v609 = vunpack.c.l.b16 %v260
    %v610 = vunpack.c.h.b16 %v260
    %v611 = vunpack.c.l.b16 %v261
    %v612 = vunpack.c.h.b16 %v261
    %v613 = vunpack.c.l.b16 %v262
    %v614 = vunpack.c.h.b16 %v262
    %v615 = vunpack.c.l.b16 %v263
    %v616 = vunpack.c.h.b16 %v263
    %v617 = vunpack.c.l.b16 %v264
    %v618 = vunpack.c.h.b16 %v264
    %v619 = vunpack.c.l.b16 %v265
    %v620 = vunpack.c.h.b16 %v265
    %v621 = vunpack.c.l.b16 %v266
    %v622 = vunpack.c.h.b16 %v266
    %v623 = vunpack.c.l.b16 %v267
    %v624 = vunpack.c.h.b16 %v267
    %v625 = vunpack.c.l.b16 %v268
    %v626 = vunpack.c.h.b16 %v268
    %v627 = vunpack.c.l.b16 %v269
    %v628 = vunpack.c.h.b16 %v269
    %v629 = vunpack.c.l.b16 %v270
    %v630 = vunpack.c.h.b16 %v270
    %v631 = vunpack.c.l.b16 %v271
    %v632 = vunpack.c.h.b16 %v271
    %v633 = vunpack.c.l.b16 %v272
    %v634 = vunpack.c.h.b16 %v272
    %v635 = vunpack.c.l.b16 %v273
    %v636 = vunpack.c.h.b16 %v273
    %v637 = vunpack.c.l.b16 %v274
    %v638 = vunpack.c.h.b16 %v274
    %v639 = vunpack.c.l.b16 %v275
    %v640 = vunpack.c.h.b16 %v275
    %v641 = vunpack.c.l.b16 %v276
    %v642 = vunpack.c.h.b16 %v276
    %v643 = vunpack.c.l.b16 %v277
    %v644 = vunpack.c.h.b16 %v277
    %v645 = vunpack.c.l.b16 %v278
    %v646 = vunpack.c.h.b16 %v278
    %v647 = vunpack.c.l.b16 %v279
    %v648 = vunpack.c.h.b16 %v279
    %v649 = vunpack.c.l.b16 %v280
    %v650 = vunpack.c.h.b16 %v280
    %v651 = vunpack.c.l.b16 %v281
    %v652 = vunpack.c.h.b16 %v281
    %v653 = vunpack.c.l.b16 %v282
    %v654 = vunpack.c.h.b16 %v282
    %v655 = vunpack.c.l.b16 %v283
    %v656 = vunpack.c.h.b16 %v283
    %v657 = vunpack.c.l.b16 %v284
    %v658 = vunpack.c.h.b16 %v284
    %v659 = vunpack.c.l.b16 %v285
    %v660 = vunpack.c.h.b16 %v285
    %v661 = vunpack.c.l.b16 %v286
    %v662 = vunpack.c.h.b16 %v286
    %v663 = vunpack.c.l.b16 %v287
    %v664 = vunpack.c.h.b16 %v287
    %v665 = vunpack.c.l.b16 %v288
    %v666 = vunpack.c.h.b16 %v288
    %v667 = vunpack.c.l.b16 %v289
    %v668 = vunpack.c.h.b16 %v289
    %v669 = vunpack.c.l.b16 %v290
    %v670 = vunpack.c.h.b16 %v290
    %v671 = vunpack.c.l.b16 %v291
    %v672 = vunpack.c.h.b16 %v291
    %v673 = vunpack.c.l.b16 %v292
    %v674 = vunpack.c.h.b16 %v292
    %v675 = vunpack.c.l.b16 %v293
    %v676 = vunpack.c.h.b16 %v293
    %v677 = vunpack.c.l.b16 %v294
    %v678 = vunpack.c.h.b16 %v294
    %v679 = vunpack.c.l.b16 %v295
    %v680 = vunpack.c.h.b16 %v295
    %v681 = vunpack.c.l.b16 %v296
    %v682 = vunpack.c.h.b16 %v296
    %v683 = vunpack.c.l.b16 %v297
    %v684 = vunpack.c.h.b16 %v297
    %v685 = vunpack.c.l.b16 %v298
    %v686 = vunpack.c.h.b16 %v298
    %v687 = vunpack.c.l.b16 %v299
    %v688 = vunpack.c.h.b16 %v299
    %v689 = vunpack.c.l.b16 %v300
    %v690 = vunpack.c.h.b16 %v300
    %v691 = vunpack.c.l.b16 %v301
    %v692 = vunpack.c.h.b16 %v301
    %v693 = vunpack.c.l.b16 %v302
    %v694 = vunpack.c.h.b16 %v302
    %v695 = vunpack.c.l.b16 %v303
    %v696 = vunpack.c.h.b16 %v303
    %v697 = vunpack.c.l.b16 %v304
    %v698 = vunpack.c.h.b16 %v304
    %v699 = vunpack.c.l.b16 %v305
    %v700 = vunpack.c.h.b16 %v305
    %v701 = vunpack.c.l.b16 %v306
    %v702 = vunpack.c.h.b16 %v306
    %v703 = vunpack.c.l.b16 %v307
    %v704 = vunpack.c.h.b16 %v307
    %v705 = vunpack.c.l.b16 %v308
    %v706 = vunpack.c.h.b16 %v308
    %v707 = vpack.c.b16 %v455, %v451
    %v708 = vpack.c.b16 %v456, %v452
    %v709 = vpack.c.b16 %v457, %v453
    %v710 = vpack.c.b16 %v458, %v454
    %v711 = vpack.c.b16 %v463, %v459
    %v712 = vpack.c.b16 %v464, %v460
    %v713 = vpack.c.b16 %v465, %v461
    %v714 = vpack.c.b16 %v466, %v462
    %v715 = vpack.c.b16 %v471, %v467
    %v716 = vpack.c.b16 %v472, %v468
    %v717 = vpack.c.b16 %v473, %v469
    %v718 = vpack.c.b16 %v474, %v470
    %v719 = vpack.c.b16 %v479, %v475
    %v720 = vpack.c.b16 %v480, %v476
    %v721 = vpack.c.b16 %v481, %v477
    %v722 = vpack.c.b16 %v482, %v478
    %v723 = vpack.c.b16 %v487, %v483
    %v724 = vpack.c.b16 %v488, %v484
    %v725 = vpack.c.b16 %v489, %v485
    %v726 = vpack.c.b16 %v490, %v486
    %v727 = vpack.c.b16 %v495, %v491
    %v728 = vpack.c.b16 %v496, %v492
    %v729 = vpack.c.b16 %v497, %v493
    %v730 = vpack.c.b16 %v498, %v494
    %v731 = vpack.c.b16 %v503, %v499
    %v732 = vpack.c.b16 %v504, %v500
    %v733 = vpack.c.b16 %v505, %v501
    %v734 = vpack.c.b16 %v506, %v502
    %v735 = vpack.c.b16 %v511, %v507
    %v736 = vpack.c.b16 %v512, %v508
    %v737 = vpack.c.b16 %v513, %v509
    %v738 = vpack.c.b16 %v514, %v510
    %v739 = vpack.c.b16 %v519, %v515
    %v740 = vpack.c.b16 %v520, %v516
    %v741 = vpack.c.b16 %v521, %v517
    %v742 = vpack.c.b16 %v522, %v518
    %v743 = vpack.c.b16 %v527, %v523
    %v744 = vpack.c.b16 %v528, %v524
    %v745 = vpack.c.b16 %v529, %v525
    %v746 = vpack.c.b16 %v530, %v526
    %v747 = vpack.c.b16 %v535, %v531
    %v748 = vpack.c.b16 %v536, %v532
    %v749 = vpack.c.b16 %v537, %v533
    %v750 = vpack.c.b16 %v538, %v534
    %v751 = vpack.c.b16 %v543, %v539
    %v752 = vpack.c.b16 %v544, %v540
    %v753 = vpack.c.b16 %v545, %v541
    %v754 = vpack.c.b16 %v546, %v542
    %v755 = vpack.c.b16 %v551, %v547
    %v756 = vpack.c.b16 %v552, %v548
    %v757 = vpack.c.b16 %v553, %v549
    %v758 = vpack.c.b16 %v554, %v550
    %v759 = vpack.c.b16 %v559, %v555
    %v760 = vpack.c.b16 %v560, %v556
    %v761 = vpack.c.b16 %v561, %v557
    %v762 = vpack.c.b16 %v562, %v558
    %v763 = vpack.c.b16 %v567, %v563
    %v764 = vpack.c.b16 %v568, %v564
    %v765 = vpack.c.b16 %v569, %v565
    %v766 = vpack.c.b16 %v570, %v566
    %v767 = vpack.c.b16 %v575, %v571
    %v768 = vpack.c.b16 %v576, %v572
    %v769 = vpack.c.b16 %v577, %v573
    %v770 = vpack.c.b16 %v578, %v574
    %v771 = vpack.c.b16 %v583, %v579
    %v772 = vpack.c.b16 %v584, %v580
    %v773 = vpack.c.b16 %v585, %v581
    %v774 = vpack.c.b16 %v586, %v582
    %v775 = vpack.c.b16 %v591, %v587
    %v776 = vpack.c.b16 %v592, %v588
    %v777 = vpack.c.b16 %v593, %v589
    %v778 = vpack.c.b16 %v594, %v590
    %v779 = vpack.c.b16 %v599, %v595
    %v780 = vpack.c.b16 %v600, %v596
    %v781 = vpack.c.b16 %v601, %v597
    %v782 = vpack.c.b16 %v602, %v598
    %v783 = vpack.c.b16 %v607, %v603
    %v784 = vpack.c.b16 %v608, %v604
    %v785 = vpack.c.b16 %v609, %v605
    %v786 = vpack.c.b16 %v610, %v606
    %v787 = vpack.c.b16 %v615, %v611
    %v788 = vpack.c.b16 %v616, %v612
    %v789 = vpack.c.b16 %v617, %v613
    %v790 = vpack.c.b16 %v618, %v614
    %v791 = vpack.c.b16 %v623, %v619
    %v792 = vpack.c.b16 %v624, %v620
    %v793 = vpack.c.b16 %v625, %v621
    %v794 = vpack.c.b16 %v626, %v622
    %v795 = vpack.c.b16 %v631, %v627
    %v796 = vpack.c.b16 %v632, %v628
    %v797 = vpack.c.b16 %v633, %v629
    %v798 = vpack.c.b16 %v634, %v630
    %v799 = vpack.c.b16 %v639, %v635
    %v800 = vpack.c.b16 %v640, %v636
    %v801 = vpack.c.b16 %v641, %v637
    %v802 = vpack.c.b16 %v642, %v638
    %v803 = vpack.c.b16 %v647, %v643
    %v804 = vpack.c.b16 %v648, %v644
    %v805 = vpack.c.b16 %v649, %v645
    %v806 = vpack.c.b16 %v650, %v646
    %v807 = vpack.c.b16 %v655, %v651
    %v808 = vpack.c.b16 %v656, %v652
    %v809 = vpack.c.b16 %v657, %v653
    %v810 = vpack.c.b16 %v658, %v654
    %v811 = vpack.c.b16 %v663, %v659
    %v812 = vpack.c.b16 %v664, %v660
    %v813 = vpack.c.b16 %v665, %v661
    %v814 = vpack.c.b16 %v666, %v662
    %v815 = vpack.c.b16 %v671, %v667
    %v816 = vpack.c.b16 %v672, %v668
    %v817 = vpack.c.b16 %v673, %v669
    %v818 = vpack.c.b16 %v674, %v670
    %v819 = vpack.c.b16 %v679, %v675
    %v820 = vpack.c.b16 %v680, %v676
    %v821 = vpack.c.b16 %v681, %v677
    %v822 = vpack.c.b16 %v682, %v678
    %v823 = vpack.c.b16 %v687, %v683
    %v824 = vpack.c.b16 %v688, %v684
    %v825 = vpack.c.b16 %v689, %v685
    %v826 = vpack.c.b16 %v690, %v686
    %v827 = vpack.c.b16 %v695, %v691
    %v828 = vpack.c.b16 %v696, %v692
    %v829 = vpack.c.b16 %v697, %v693
    %v830 = vpack.c.b16 %v698, %v694
    %v831 = vpack.c.b16 %v703, %v699
    %v832 = vpack.c.b16 %v704, %v700
    %v833 = vpack.c.b16 %v705, %v701
    %v834 = vpack.c.b16 %v706, %v702
    %963 = vmatpush.bf16.msra.mxu0 %v735
    %964 = vmatpush.bf16.msra.mxu0 %v731
    %965 = vmatpush.bf16.msra.mxu0 %v727
    %966 = vmatpush.bf16.msra.mxu0 %v723
    %967 = vmatpush.bf16.msra.mxu0 %v719
    %968 = vmatpush.bf16.msra.mxu0 %v715
    %969 = vmatpush.bf16.msra.mxu0 %v711
    %970 = vmatpush.bf16.msra.mxu0 %v707
    %971 = vmatmul.bf16.gmra.mxu0 %v315
    %v972 = vpop.f32.mrf.mxu0
    %v973 = vadd.f32 %v319, %v972
    %v974 = vpop.f32.mrf.mxu0
    %975 = vdwg.mxu0
    %976 = vmatpush.bf16.msra.mxu0 %v767
    %977 = vmatpush.bf16.msra.mxu0 %v763
    %978 = vmatpush.bf16.msra.mxu0 %v759
    %979 = vmatpush.bf16.msra.mxu0 %v755
    %980 = vmatpush.bf16.msra.mxu0 %v751
    %981 = vmatpush.bf16.msra.mxu0 %v747
    %982 = vmatpush.bf16.msra.mxu0 %v743
    %983 = vmatpush.bf16.msra.mxu0 %v739
    %984 = vmatmul.bf16.gmra.mxu0 %v316
    %v985 = vpop.f32.mrf.mxu0
    %v986 = vadd.f32 %v973, %v985
    %v987 = vpop.f32.mrf.mxu0
    %988 = vdwg.mxu0
    %989 = vmatpush.bf16.msra.mxu0 %v799
    %990 = vmatpush.bf16.msra.mxu0 %v795
    %991 = vmatpush.bf16.msra.mxu0 %v791
    %992 = vmatpush.bf16.msra.mxu0 %v787
    %993 = vmatpush.bf16.msra.mxu0 %v783
    %994 = vmatpush.bf16.msra.mxu0 %v779
    %995 = vmatpush.bf16.msra.mxu0 %v775
    %996 = vmatpush.bf16.msra.mxu0 %v771
    %997 = vmatmul.bf16.gmra.mxu0 %v317
    %v998 = vpop.f32.mrf.mxu0
    %v999 = vadd.f32 %v986, %v998
    %v1000 = vpop.f32.mrf.mxu0
    %1001 = vdwg.mxu0
    %1002 = vmatpush.bf16.msra.mxu0 %v831
    %1003 = vmatpush.bf16.msra.mxu0 %v827
    %1004 = vmatpush.bf16.msra.mxu0 %v823
    %1005 = vmatpush.bf16.msra.mxu0 %v819
    %1006 = vmatpush.bf16.msra.mxu0 %v815
    %1007 = vmatpush.bf16.msra.mxu0 %v811
    %1008 = vmatpush.bf16.msra.mxu0 %v807
    %1009 = vmatpush.bf16.msra.mxu0 %v803
    %1010 = vmatmul.bf16.gmra.mxu0 %v318
    %v1011 = vpop.f32.mrf.mxu0
    %v1012 = vadd.f32 %v999, %v1011
    %v1013 = vpop.f32.mrf.mxu0
    %1014 = vdwg.mxu0
    %1015 = vmatpush.bf16.msra.mxu0 %v736
    %1016 = vmatpush.bf16.msra.mxu0 %v732
    %1017 = vmatpush.bf16.msra.mxu0 %v728
    %1018 = vmatpush.bf16.msra.mxu0 %v724
    %1019 = vmatpush.bf16.msra.mxu0 %v720
    %1020 = vmatpush.bf16.msra.mxu0 %v716
    %1021 = vmatpush.bf16.msra.mxu0 %v712
    %1022 = vmatpush.bf16.msra.mxu0 %v708
    %1023 = vmatmul.bf16.gmra.mxu0 %v315
    %v1024 = vpop.f32.mrf.mxu0
    %v1025 = vadd.f32 %v320, %v1024
    %v1026 = vpop.f32.mrf.mxu0
    %1027 = vdwg.mxu0
    %1028 = vmatpush.bf16.msra.mxu0 %v768
    %1029 = vmatpush.bf16.msra.mxu0 %v764
    %1030 = vmatpush.bf16.msra.mxu0 %v760
    %1031 = vmatpush.bf16.msra.mxu0 %v756
    %1032 = vmatpush.bf16.msra.mxu0 %v752
    %1033 = vmatpush.bf16.msra.mxu0 %v748
    %1034 = vmatpush.bf16.msra.mxu0 %v744
    %1035 = vmatpush.bf16.msra.mxu0 %v740
    %1036 = vmatmul.bf16.gmra.mxu0 %v316
    %v1037 = vpop.f32.mrf.mxu0
    %v1038 = vadd.f32 %v1025, %v1037
    %v1039 = vpop.f32.mrf.mxu0
    %1040 = vdwg.mxu0
    %1041 = vmatpush.bf16.msra.mxu0 %v800
    %1042 = vmatpush.bf16.msra.mxu0 %v796
    %1043 = vmatpush.bf16.msra.mxu0 %v792
    %1044 = vmatpush.bf16.msra.mxu0 %v788
    %1045 = vmatpush.bf16.msra.mxu0 %v784
    %1046 = vmatpush.bf16.msra.mxu0 %v780
    %1047 = vmatpush.bf16.msra.mxu0 %v776
    %1048 = vmatpush.bf16.msra.mxu0 %v772
    %1049 = vmatmul.bf16.gmra.mxu0 %v317
    %v1050 = vpop.f32.mrf.mxu0
    %v1051 = vadd.f32 %v1038, %v1050
    %v1052 = vpop.f32.mrf.mxu0
    %1053 = vdwg.mxu0
    %1054 = vmatpush.bf16.msra.mxu0 %v832
    %1055 = vmatpush.bf16.msra.mxu0 %v828
    %1056 = vmatpush.bf16.msra.mxu0 %v824
    %1057 = vmatpush.bf16.msra.mxu0 %v820
    %1058 = vmatpush.bf16.msra.mxu0 %v816
    %1059 = vmatpush.bf16.msra.mxu0 %v812
    %1060 = vmatpush.bf16.msra.mxu0 %v808
    %1061 = vmatpush.bf16.msra.mxu0 %v804
    %1062 = vmatmul.bf16.gmra.mxu0 %v318
    %v1063 = vpop.f32.mrf.mxu0
    %v1064 = vadd.f32 %v1051, %v1063
    %v1065 = vpop.f32.mrf.mxu0
    %1066 = vdwg.mxu0
    %1067 = vmatpush.bf16.msra.mxu0 %v737
    %1068 = vmatpush.bf16.msra.mxu0 %v733
    %1069 = vmatpush.bf16.msra.mxu0 %v729
    %1070 = vmatpush.bf16.msra.mxu0 %v725
    %1071 = vmatpush.bf16.msra.mxu0 %v721
    %1072 = vmatpush.bf16.msra.mxu0 %v717
    %1073 = vmatpush.bf16.msra.mxu0 %v713
    %1074 = vmatpush.bf16.msra.mxu0 %v709
    %1075 = vmatmul.bf16.gmra.mxu0 %v315
    %v1076 = vpop.f32.mrf.mxu0
    %v1077 = vadd.f32 %v321, %v1076
    %v1078 = vpop.f32.mrf.mxu0
    %1079 = vdwg.mxu0
    %1080 = vmatpush.bf16.msra.mxu0 %v769
    %1081 = vmatpush.bf16.msra.mxu0 %v765
    %1082 = vmatpush.bf16.msra.mxu0 %v761
    %1083 = vmatpush.bf16.msra.mxu0 %v757
    %1084 = vmatpush.bf16.msra.mxu0 %v753
    %1085 = vmatpush.bf16.msra.mxu0 %v749
    %1086 = vmatpush.bf16.msra.mxu0 %v745
    %1087 = vmatpush.bf16.msra.mxu0 %v741
    %1088 = vmatmul.bf16.gmra.mxu0 %v316
    %v1089 = vpop.f32.mrf.mxu0
    %v1090 = vadd.f32 %v1077, %v1089
    %v1091 = vpop.f32.mrf.mxu0
    %1092 = vdwg.mxu0
    %1093 = vmatpush.bf16.msra.mxu0 %v801
    %1094 = vmatpush.bf16.msra.mxu0 %v797
    %1095 = vmatpush.bf16.msra.mxu0 %v793
    %1096 = vmatpush.bf16.msra.mxu0 %v789
    %1097 = vmatpush.bf16.msra.mxu0 %v785
    %1098 = vmatpush.bf16.msra.mxu0 %v781
    %1099 = vmatpush.bf16.msra.mxu0 %v777
    %1100 = vmatpush.bf16.msra.mxu0 %v773
    %1101 = vmatmul.bf16.gmra.mxu0 %v317
    %v1102 = vpop.f32.mrf.mxu0
    %v1103 = vadd.f32 %v1090, %v1102
    %v1104 = vpop.f32.mrf.mxu0
    %1105 = vdwg.mxu0
    %1106 = vmatpush.bf16.msra.mxu0 %v833
    %1107 = vmatpush.bf16.msra.mxu0 %v829
    %1108 = vmatpush.bf16.msra.mxu0 %v825
    %1109 = vmatpush.bf16.msra.mxu0 %v821
    %1110 = vmatpush.bf16.msra.mxu0 %v817
    %1111 = vmatpush.bf16.msra.mxu0 %v813
    %1112 = vmatpush.bf16.msra.mxu0 %v809
    %1113 = vmatpush.bf16.msra.mxu0 %v805
    %1114 = vmatmul.bf16.gmra.mxu0 %v318
    %v1115 = vpop.f32.mrf.mxu0
    %v1116 = vadd.f32 %v1103, %v1115
    %v1117 = vpop.f32.mrf.mxu0
    %1118 = vdwg.mxu0
    %1119 = vmatpush.bf16.msra.mxu0 %v738
    %1120 = vmatpush.bf16.msra.mxu0 %v734
    %1121 = vmatpush.bf16.msra.mxu0 %v730
    %1122 = vmatpush.bf16.msra.mxu0 %v726
    %1123 = vmatpush.bf16.msra.mxu0 %v722
    %1124 = vmatpush.bf16.msra.mxu0 %v718
    %1125 = vmatpush.bf16.msra.mxu0 %v714
    %1126 = vmatpush.bf16.msra.mxu0 %v710
    %1127 = vmatmul.bf16.gmra.mxu0 %v315
    %v1128 = vpop.f32.mrf.mxu0
    %v1129 = vadd.f32 %v322, %v1128
    %v1130 = vpop.f32.mrf.mxu0
    %1131 = vdwg.mxu0
    %1132 = vmatpush.bf16.msra.mxu0 %v770
    %1133 = vmatpush.bf16.msra.mxu0 %v766
    %1134 = vmatpush.bf16.msra.mxu0 %v762
    %1135 = vmatpush.bf16.msra.mxu0 %v758
    %1136 = vmatpush.bf16.msra.mxu0 %v754
    %1137 = vmatpush.bf16.msra.mxu0 %v750
    %1138 = vmatpush.bf16.msra.mxu0 %v746
    %1139 = vmatpush.bf16.msra.mxu0 %v742
    %1140 = vmatmul.bf16.gmra.mxu0 %v316
    %v1141 = vpop.f32.mrf.mxu0
    %v1142 = vadd.f32 %v1129, %v1141
    %v1143 = vpop.f32.mrf.mxu0
    %1144 = vdwg.mxu0
    %1145 = vmatpush.bf16.msra.mxu0 %v802
    %1146 = vmatpush.bf16.msra.mxu0 %v798
    %1147 = vmatpush.bf16.msra.mxu0 %v794
    %1148 = vmatpush.bf16.msra.mxu0 %v790
    %1149 = vmatpush.bf16.msra.mxu0 %v786
    %1150 = vmatpush.bf16.msra.mxu0 %v782
    %1151 = vmatpush.bf16.msra.mxu0 %v778
    %1152 = vmatpush.bf16.msra.mxu0 %v774
    %1153 = vmatmul.bf16.gmra.mxu0 %v317
    %v1154 = vpop.f32.mrf.mxu0
    %v1155 = vadd.f32 %v1142, %v1154
    %v1156 = vpop.f32.mrf.mxu0
    %1157 = vdwg.mxu0
    %1158 = vmatpush.bf16.msra.mxu0 %v834
    %1159 = vmatpush.bf16.msra.mxu0 %v830
    %1160 = vmatpush.bf16.msra.mxu0 %v826
    %1161 = vmatpush.bf16.msra.mxu0 %v822
    %1162 = vmatpush.bf16.msra.mxu0 %v818
    %1163 = vmatpush.bf16.msra.mxu0 %v814
    %1164 = vmatpush.bf16.msra.mxu0 %v810
    %1165 = vmatpush.bf16.msra.mxu0 %v806
    %1166 = vmatmul.bf16.gmra.mxu0 %v318
    %v1167 = vpop.f32.mrf.mxu0
    %v1168 = vadd.f32 %v1155, %v1167
    %v1169 = vpop.f32.mrf.mxu0
    %1170 = vdwg.mxu0
    %v1171 = vmax.f32 %v1012, 0.0
    %v1172 = vmax.f32 %v1064, 0.0
    %v1173 = vmax.f32 %v1116, 0.0
    %v1174 = vmax.f32 %v1168, 0.0
    %v1175 = vld [vmem:[#allocation7] sm:$0xf]
    %v1176 = vld [vmem:[#allocation7 + $0x4] sm:$0xf]
    %v1177 = vld [vmem:[#allocation7 + $0x8] sm:$0xf]
    %v1178 = vld [vmem:[#allocation7 + $0xc] sm:$0xf]
    %v1179 = vld [vmem:[#allocation7 + $0x10] sm:$0xf]
    %v1180 = vld [vmem:[#allocation7 + $0x14] sm:$0xf]
    %v1181 = vld [vmem:[#allocation7 + $0x18] sm:$0xf]
    %v1182 = vld [vmem:[#allocation7 + $0x1c] sm:$0xf]
    %v1183 = vld [vmem:[#allocation7 + $0x20] sm:$0xf]
    %v1184 = vld [vmem:[#allocation7 + $0x24] sm:$0xf]
    %v1185 = vld [vmem:[#allocation7 + $0x28] sm:$0xf]
    %v1186 = vld [vmem:[#allocation7 + $0x2c] sm:$0xf]
    %v1187 = vld [vmem:[#allocation7 + $0x30] sm:$0xf]
    %v1188 = vld [vmem:[#allocation7 + $0x34] sm:$0xf]
    %v1189 = vld [vmem:[#allocation7 + $0x38] sm:$0xf]
    %v1190 = vld [vmem:[#allocation7 + $0x3c] sm:$0xf]
    %v1191 = vld [vmem:[#allocation7 + $0x40] sm:$0xf]
    %v1192 = vld [vmem:[#allocation7 + $0x44] sm:$0xf]
    %v1193 = vld [vmem:[#allocation7 + $0x48] sm:$0xf]
    %v1194 = vld [vmem:[#allocation7 + $0x4c] sm:$0xf]
    %v1195 = vld [vmem:[#allocation7 + $0x50] sm:$0xf]
    %v1196 = vld [vmem:[#allocation7 + $0x54] sm:$0xf]
    %v1197 = vld [vmem:[#allocation7 + $0x58] sm:$0xf]
    %v1198 = vld [vmem:[#allocation7 + $0x5c] sm:$0xf]
    %v1199 = vld [vmem:[#allocation7 + $0x60] sm:$0xf]
    %v1200 = vld [vmem:[#allocation7 + $0x64] sm:$0xf]
    %v1201 = vld [vmem:[#allocation7 + $0x68] sm:$0xf]
    %v1202 = vld [vmem:[#allocation7 + $0x6c] sm:$0xf]
    %v1203 = vld [vmem:[#allocation7 + $0x70] sm:$0xf]
    %v1204 = vld [vmem:[#allocation7 + $0x74] sm:$0xf]
    %v1205 = vld [vmem:[#allocation7 + $0x78] sm:$0xf]
    %v1206 = vld [vmem:[#allocation7 + $0x7c] sm:$0xf]
    %v1207 = vld [vmem:[#allocation7 + $0x80] sm:$0xf]
    %v1208 = vld [vmem:[#allocation7 + $0x84] sm:$0xf]
    %v1209 = vld [vmem:[#allocation7 + $0x88] sm:$0xf]
    %v1210 = vld [vmem:[#allocation7 + $0x8c] sm:$0xf]
    %v1211 = vld [vmem:[#allocation7 + $0x90] sm:$0xf]
    %v1212 = vld [vmem:[#allocation7 + $0x94] sm:$0xf]
    %v1213 = vld [vmem:[#allocation7 + $0x98] sm:$0xf]
    %v1214 = vld [vmem:[#allocation7 + $0x9c] sm:$0xf]
    %v1215 = vld [vmem:[#allocation7 + $0xa0] sm:$0xf]
    %v1216 = vld [vmem:[#allocation7 + $0xa4] sm:$0xf]
    %v1217 = vld [vmem:[#allocation7 + $0xa8] sm:$0xf]
    %v1218 = vld [vmem:[#allocation7 + $0xac] sm:$0xf]
    %v1219 = vld [vmem:[#allocation7 + $0xb0] sm:$0xf]
    %v1220 = vld [vmem:[#allocation7 + $0xb4] sm:$0xf]
    %v1221 = vld [vmem:[#allocation7 + $0xb8] sm:$0xf]
    %v1222 = vld [vmem:[#allocation7 + $0xbc] sm:$0xf]
    %v1223 = vld [vmem:[#allocation7 + $0xc0] sm:$0xf]
    %v1224 = vld [vmem:[#allocation7 + $0xc4] sm:$0xf]
    %v1225 = vld [vmem:[#allocation7 + $0xc8] sm:$0xf]
    %v1226 = vld [vmem:[#allocation7 + $0xcc] sm:$0xf]
    %v1227 = vld [vmem:[#allocation7 + $0xd0] sm:$0xf]
    %v1228 = vld [vmem:[#allocation7 + $0xd4] sm:$0xf]
    %v1229 = vld [vmem:[#allocation7 + $0xd8] sm:$0xf]
    %v1230 = vld [vmem:[#allocation7 + $0xdc] sm:$0xf]
    %v1231 = vld [vmem:[#allocation7 + $0xe0] sm:$0xf]
    %v1232 = vld [vmem:[#allocation7 + $0xe4] sm:$0xf]
    %v1233 = vld [vmem:[#allocation7 + $0xe8] sm:$0xf]
    %v1234 = vld [vmem:[#allocation7 + $0xec] sm:$0xf]
    %v1235 = vld [vmem:[#allocation7 + $0xf0] sm:$0xf]
    %v1236 = vld [vmem:[#allocation7 + $0xf4] sm:$0xf]
    %v1237 = vld [vmem:[#allocation7 + $0xf8] sm:$0xf]
    %v1238 = vld [vmem:[#allocation7 + $0xfc] sm:$0xf]
    %v1239 = vld [vmem:[#allocation7 + $0x100] sm:$0x1]
    %v1240 = vunpack.c.l.bf16 %v1239
    %v1241 = vpack.c.bf16 %v1171, %v1171
    %v1242 = vpack.c.bf16 %v1172, %v1172
    %v1243 = vpack.c.bf16 %v1173, %v1173
    %v1244 = vpack.c.bf16 %v1174, %v1174
    %v1245 = vperm.slane %v1240, 0
    %v1310 = vunpack.c.l.b16 %v1175
    %v1311 = vunpack.c.l.b16 %v1176
    %v1312 = vunpack.c.l.b16 %v1177
    %v1313 = vunpack.c.l.b16 %v1178
    %v1314 = vunpack.c.l.b16 %v1179
    %v1315 = vunpack.c.l.b16 %v1180
    %v1316 = vunpack.c.l.b16 %v1181
    %v1317 = vunpack.c.l.b16 %v1182
    %v1318 = vunpack.c.l.b16 %v1183
    %v1319 = vunpack.c.l.b16 %v1184
    %v1320 = vunpack.c.l.b16 %v1185
    %v1321 = vunpack.c.l.b16 %v1186
    %v1322 = vunpack.c.l.b16 %v1187
    %v1323 = vunpack.c.l.b16 %v1188
    %v1324 = vunpack.c.l.b16 %v1189
    %v1325 = vunpack.c.l.b16 %v1190
    %v1326 = vunpack.c.l.b16 %v1191
    %v1327 = vunpack.c.l.b16 %v1192
    %v1328 = vunpack.c.l.b16 %v1193
    %v1329 = vunpack.c.l.b16 %v1194
    %v1330 = vunpack.c.l.b16 %v1195
    %v1331 = vunpack.c.l.b16 %v1196
    %v1332 = vunpack.c.l.b16 %v1197
    %v1333 = vunpack.c.l.b16 %v1198
    %v1334 = vunpack.c.l.b16 %v1199
    %v1335 = vunpack.c.l.b16 %v1200
    %v1336 = vunpack.c.l.b16 %v1201
    %v1337 = vunpack.c.l.b16 %v1202
    %v1338 = vunpack.c.l.b16 %v1203
    %v1339 = vunpack.c.l.b16 %v1204
    %v1340 = vunpack.c.l.b16 %v1205
    %v1341 = vunpack.c.l.b16 %v1206
    %v1342 = vunpack.c.l.b16 %v1207
    %v1343 = vunpack.c.l.b16 %v1208
    %v1344 = vunpack.c.l.b16 %v1209
    %v1345 = vunpack.c.l.b16 %v1210
    %v1346 = vunpack.c.l.b16 %v1211
    %v1347 = vunpack.c.l.b16 %v1212
    %v1348 = vunpack.c.l.b16 %v1213
    %v1349 = vunpack.c.l.b16 %v1214
    %v1350 = vunpack.c.l.b16 %v1215
    %v1351 = vunpack.c.l.b16 %v1216
    %v1352 = vunpack.c.l.b16 %v1217
    %v1353 = vunpack.c.l.b16 %v1218
    %v1354 = vunpack.c.l.b16 %v1219
    %v1355 = vunpack.c.l.b16 %v1220
    %v1356 = vunpack.c.l.b16 %v1221
    %v1357 = vunpack.c.l.b16 %v1222
    %v1358 = vunpack.c.l.b16 %v1223
    %v1359 = vunpack.c.l.b16 %v1224
    %v1360 = vunpack.c.l.b16 %v1225
    %v1361 = vunpack.c.l.b16 %v1226
    %v1362 = vunpack.c.l.b16 %v1227
    %v1363 = vunpack.c.l.b16 %v1228
    %v1364 = vunpack.c.l.b16 %v1229
    %v1365 = vunpack.c.l.b16 %v1230
    %v1366 = vunpack.c.l.b16 %v1231
    %v1367 = vunpack.c.l.b16 %v1232
    %v1368 = vunpack.c.l.b16 %v1233
    %v1369 = vunpack.c.l.b16 %v1234
    %v1370 = vunpack.c.l.b16 %v1235
    %v1371 = vunpack.c.l.b16 %v1236
    %v1372 = vunpack.c.l.b16 %v1237
    %v1373 = vunpack.c.l.b16 %v1238
    %v1374 = vpack.c.b16 %v1311, %v1310
    %v1375 = vpack.c.b16 %v1313, %v1312
    %v1376 = vpack.c.b16 %v1315, %v1314
    %v1377 = vpack.c.b16 %v1317, %v1316
    %v1378 = vpack.c.b16 %v1319, %v1318
    %v1379 = vpack.c.b16 %v1321, %v1320
    %v1380 = vpack.c.b16 %v1323, %v1322
    %v1381 = vpack.c.b16 %v1325, %v1324
    %v1382 = vpack.c.b16 %v1327, %v1326
    %v1383 = vpack.c.b16 %v1329, %v1328
    %v1384 = vpack.c.b16 %v1331, %v1330
    %v1385 = vpack.c.b16 %v1333, %v1332
    %v1386 = vpack.c.b16 %v1335, %v1334
    %v1387 = vpack.c.b16 %v1337, %v1336
    %v1388 = vpack.c.b16 %v1339, %v1338
    %v1389 = vpack.c.b16 %v1341, %v1340
    %v1390 = vpack.c.b16 %v1343, %v1342
    %v1391 = vpack.c.b16 %v1345, %v1344
    %v1392 = vpack.c.b16 %v1347, %v1346
    %v1393 = vpack.c.b16 %v1349, %v1348
    %v1394 = vpack.c.b16 %v1351, %v1350
    %v1395 = vpack.c.b16 %v1353, %v1352
    %v1396 = vpack.c.b16 %v1355, %v1354
    %v1397 = vpack.c.b16 %v1357, %v1356
    %v1398 = vpack.c.b16 %v1359, %v1358
    %v1399 = vpack.c.b16 %v1361, %v1360
    %v1400 = vpack.c.b16 %v1363, %v1362
    %v1401 = vpack.c.b16 %v1365, %v1364
    %v1402 = vpack.c.b16 %v1367, %v1366
    %v1403 = vpack.c.b16 %v1369, %v1368
    %v1404 = vpack.c.b16 %v1371, %v1370
    %v1405 = vpack.c.b16 %v1373, %v1372
    %1438 = vmatpush.bf16.msra.mxu0 %v1381
    %1439 = vmatpush.bf16.msra.mxu0 %v1380
    %1440 = vmatpush.bf16.msra.mxu0 %v1379
    %1441 = vmatpush.bf16.msra.mxu0 %v1378
    %1442 = vmatpush.bf16.msra.mxu0 %v1377
    %1443 = vmatpush.bf16.msra.mxu0 %v1376
    %1444 = vmatpush.bf16.msra.mxu0 %v1375
    %1445 = vmatpush.bf16.msra.mxu0 %v1374
    %1446 = vmatmul.bf16.gmra.mxu0 %v1241
    %v1447 = vpop.f32.mrf.mxu0
    %v1448 = vadd.f32 %v1245, %v1447
    %v1449 = vpop.f32.mrf.mxu0
    %1450 = vdwg.mxu0
    %1451 = vmatpush.bf16.msra.mxu0 %v1389
    %1452 = vmatpush.bf16.msra.mxu0 %v1388
    %1453 = vmatpush.bf16.msra.mxu0 %v1387
    %1454 = vmatpush.bf16.msra.mxu0 %v1386
    %1455 = vmatpush.bf16.msra.mxu0 %v1385
    %1456 = vmatpush.bf16.msra.mxu0 %v1384
    %1457 = vmatpush.bf16.msra.mxu0 %v1383
    %1458 = vmatpush.bf16.msra.mxu0 %v1382
    %1459 = vmatmul.bf16.gmra.mxu0 %v1242
    %v1460 = vpop.f32.mrf.mxu0
    %v1461 = vadd.f32 %v1448, %v1460
    %v1462 = vpop.f32.mrf.mxu0
    %1463 = vdwg.mxu0
    %1464 = vmatpush.bf16.msra.mxu0 %v1397
    %1465 = vmatpush.bf16.msra.mxu0 %v1396
    %1466 = vmatpush.bf16.msra.mxu0 %v1395
    %1467 = vmatpush.bf16.msra.mxu0 %v1394
    %1468 = vmatpush.bf16.msra.mxu0 %v1393
    %1469 = vmatpush.bf16.msra.mxu0 %v1392
    %1470 = vmatpush.bf16.msra.mxu0 %v1391
    %1471 = vmatpush.bf16.msra.mxu0 %v1390
    %1472 = vmatmul.bf16.gmra.mxu0 %v1243
    %v1473 = vpop.f32.mrf.mxu0
    %v1474 = vadd.f32 %v1461, %v1473
    %v1475 = vpop.f32.mrf.mxu0
    %1476 = vdwg.mxu0
    %1477 = vmatpush.bf16.msra.mxu0 %v1405
    %1478 = vmatpush.bf16.msra.mxu0 %v1404
    %1479 = vmatpush.bf16.msra.mxu0 %v1403
    %1480 = vmatpush.bf16.msra.mxu0 %v1402
    %1481 = vmatpush.bf16.msra.mxu0 %v1401
    %1482 = vmatpush.bf16.msra.mxu0 %v1400
    %1483 = vmatpush.bf16.msra.mxu0 %v1399
    %1484 = vmatpush.bf16.msra.mxu0 %v1398
    %1485 = vmatmul.bf16.gmra.mxu0 %v1244
    %v1486 = vpop.f32.mrf.mxu0
    %v1487 = vadd.f32 %v1474, %v1486
    %v1488 = vpop.f32.mrf.mxu0
    %1489 = vdwg.mxu0
    %1490 = vst [vmem:[#allocation8] sm:$0xff] %v1487
    // Predicated region
    $region26: #{decoder_brain_forward_padded.1} parent=1 // pred_check
      _
    $region27: #{decoder_brain_forward_padded.1} parent=1 // pred_check_branch
      %1492 = sbr.rel (0) target = $region29
    $region28: #{decoder_brain_forward_padded.1} parent=1 // pred_region
      %1494 = vsyncadd [#allocation4], 0
      %s1496 = sshll.u32 [#allocation8], 4
      %s1497 = int_to_ptr.vmem [resolvable:$true] %s1496
      %s1498 = sshll.u32 %s3, 4
      %s1499 = int_to_ptr.hbm [resolvable:$true] %s1498
      %1501 = dma.vmem_to_hbm [thread:$0]  %s1497, 128, %s1499, [#allocation4]
    $region29: #{decoder_brain_forward_padded.1} parent=1 // pred_fallthru
      _
    // Predicated region
    $region30: #{decoder_brain_forward_padded.1} parent=1 // pred_check
      _
    $region31: #{decoder_brain_forward_padded.1} parent=1 // pred_check_branch
      %1503 = sbr.rel (0) target = $region33
    $region32: #{decoder_brain_forward_padded.1} parent=1 // pred_region
      %1505 = dma.done [#allocation4], 128
    $region33: #{decoder_brain_forward_padded.1} parent=1 // pred_fallthru
      _
    %1506 = vsyncpa [#allocation3], 1
    %1507 = vsyncpa [#allocation6], 1
    %1508 = vsyncpa [#allocation4], 1

</llo_original>
